<compile_context>
chip_gen: v7x
topology: tpu7x:2x2x1
jax: 0.10.0
libtpu: 0.0.40
codegen_flags: <defaults>
</compile_context>

<pallas_src>
import jax
import jax.numpy as jnp
from jax.experimental import pallas as pl
from jax.experimental.pallas import tpu as pltpu


# ----------------------------- kernel -------------------------------------- #

def _value_network_kernel(xt_ref, w1_ref, b1_ref, w2_ref, b2_ref, w3_ref, b3_ref, out_ref):
    """One batch tile; batch is on the lane (last) axis throughout.

      xt_ref : (num_inputs, TILE_B)   state tile, transposed (compute dtype)
      w1_ref : (hidden, num_inputs)   b1_ref: (hidden, 1)  (f32)
      w2_ref : (hidden, hidden)       b2_ref: (hidden, 1)  (f32)
      w3_ref : (hidden, 1)  (f32)     b3_ref: (1, 1)       (f32)
      out_ref: (1, TILE_B)            lane-dense Q-values  (f32)
    """
    x = xt_ref[...]

    # layer 1 (MXU): (hidden, K) @ (K, TILE_B) -> (hidden, TILE_B), f32 accumulation.
    h1 = jnp.dot(w1_ref[...], x, preferred_element_type=jnp.float32) + b1_ref[...]
    h1 = jnp.maximum(h1, 0.0)  # elementwise stays f32 (cheap on all gens, required on v5e)

    # layer 2 (MXU); only the MXU operand is cast to the compute dtype.
    h2 = jnp.dot(w2_ref[...], h1.astype(w2_ref.dtype),
                 preferred_element_type=jnp.float32) + b2_ref[...]
    h2 = jnp.maximum(h2, 0.0)

    # layer 3: N=1 projection as VPU multiply + cross-sublane reduce (stays off the MXU);
    # result is already (1, TILE_B) -> unmasked lane-dense store.
    out_ref[...] = jnp.sum(h2 * w3_ref[...], axis=0, keepdims=True) + b3_ref[...]


# --------------------------- hardware helpers ------------------------------- #

def _device_kind():
    try:
        return (jax.devices()[0].device_kind or "").lower()
    except Exception:
        return ""


def _is_v5e(kind):
    return ("v5 lite" in kind) or ("v5e" in kind) or ("v5lite" in kind)


def _is_v7(kind):
    return "v7" in kind


def _resolve_compute_dtype(compute_dtype):
    """bf16 on v6e/v7x (and other bf16-friendly chips), f32 on v5e / unknown."""
    if compute_dtype is not None:
        return compute_dtype
    kind = _device_kind()
    if "tpu" not in kind or _is_v5e(kind):
        return jnp.float32
    return jnp.bfloat16


def _round_up(x, m):
    return ((x + m - 1) // m) * m


def _resolve_tile_b(batch, tile_b, kind):
    """Pick a big, MXU-aligned batch tile; keep >=2 grid steps on v7x."""
    mult = 512 if _is_v5e(kind) else 256        # MXU N-dim: 4x128^2 (v5e) vs 2x256^2 (v6e/v7x)
    if tile_b is None:
        tile_b = 1024                           # review: 512-2048; grid overhead becomes negligible
    tile_b = _round_up(max(int(tile_b), 128), mult)
    tile_b = min(tile_b, _round_up(batch, mult))       # never pad more than one tile's worth
    if _is_v7(kind):
        # Batch is the only "parallel" axis; keep both TensorCores fed.
        tile_b = min(tile_b, max(mult, _round_up((batch + 1) // 2, mult)))
    return tile_b


def _vmem_limit_bytes(num_inputs, hidden, tile_b, compute_itemsize, single_buffer_weights, kind):
    stream = 2 * num_inputs * tile_b * compute_itemsize     # double-buffered state tile
    stream += 2 * tile_b * 4                                 # double-buffered (1, tile_b) f32 output
    inter = 2 * hidden * tile_b * 4                          # h1 + h2 f32 intermediates
    wmul = 1 if single_buffer_weights else 2
    weights = wmul * ((hidden * num_inputs + hidden * hidden) * compute_itemsize
                      + (3 * hidden + 2) * 4)                # b1, b2, w3, b3 in f32
    budget = stream + inter + weights
    limit = int(budget * 1.5) + (8 << 20)                    # headroom for Mosaic scratch
    cap = (56 << 20) if _is_v7(kind) else (100 << 20)        # v7x: 64 MiB physical VMEM
    return max(32 << 20, min(limit, cap))


# ------------------------------ wrapper ------------------------------------- #

def value_network_forward(state, params, *, tile_b=None, compute_dtype=None,
                          state_is_transposed=False):
    """Forward pass matching the PyTorch ValueNetwork.

    state: (B, num_inputs) f32, or (num_inputs, B) if state_is_transposed=True
           (lets upstream code skip the wrapper transpose entirely).
    Returns (B, 1) f32.
    """
    w1, b1, w2, b2, w3, b3 = (params["w1"], params["b1"], params["w2"],
                              params["b2"], params["w3"], params["b3"])
    kind = _device_kind()
    cd = _resolve_compute_dtype(compute_dtype)
    hidden = w1.shape[0]

    if state_is_transposed:
        num_inputs, B = state.shape
    else:
        B, num_inputs = state.shape

    tb = _resolve_tile_b(B, tile_b, kind)
    num_tiles = pl.cdiv(B, tb)
    b_pad = num_tiles * tb

    # Batch -> lane axis. Cast to the compute dtype FIRST so the materialized padded /
    # transposed copy of the streamed operand is half-width (halves write + kernel re-read).
    if state_is_transposed:
        xt = jnp.pad(state.astype(cd), ((0, 0), (0, b_pad - B)))
    else:
        xt = jnp.pad(state.astype(cd), ((0, b_pad - B), (0, 0))).T
    w1c = w1.astype(cd)
    w2c = w2.astype(cd)

    # Constant index maps keep weights/biases VMEM-resident across the grid. Once they are
    # big enough to matter (large hidden), single-buffer them so double-buffering doesn't
    # eat the v7x VMEM budget; at tiny sizes keep the default (previously validated) path.
    resident_bytes = (w1c.size * w1c.dtype.itemsize + w2c.size * w2c.dtype.itemsize
                      + (b1.size + b2.size + w3.size + b3.size) * 4)
    single_buf = resident_bytes > (2 << 20)

    def const(arr):
        if single_buf:
            return pl.BlockSpec(arr.shape, lambda i: (0, 0), pipeline_mode=pl.Buffered(1))
        return pl.BlockSpec(arr.shape, lambda i: (0, 0))

    out = pl.pallas_call(
        _value_network_kernel,
        out_shape=jax.ShapeDtypeStruct((1, b_pad), jnp.float32),
        grid_spec=pltpu.PrefetchScalarGridSpec(
            num_scalar_prefetch=0,
            grid=(num_tiles,),
            in_specs=[
                pl.BlockSpec((num_inputs, tb), lambda i: (0, i)),   # state tile (lane-dense)
                const(w1c), const(b1),
                const(w2c), const(b2),
                const(w3), const(b3),
            ],
            out_specs=pl.BlockSpec((1, tb), lambda i: (0, i)),       # lane-dense output
        ),
        compiler_params=pltpu.CompilerParams(
            dimension_semantics=("parallel",),   # megacore: shard batch tiles across TCs
            vmem_limit_bytes=_vmem_limit_bytes(num_inputs, hidden, tb,
                                               jnp.dtype(cd).itemsize, single_buf, kind),
        ),
    )(xt, w1c, b1, w2c, b2, w3, b3)

    # (1, B_pad) -> (B, 1): slice off padded lanes (required), layout plumbing only.
    return out[0, :B].reshape(B, 1)


# ------------------------------ init / test --------------------------------- #

def _xavier_uniform(key, shape, fan_in, fan_out, gain=1.0):
    # Matches torch.nn.init.xavier_uniform_ (gain=1): U(-a, a), a = gain*sqrt(6/(fan_in+fan_out))
    a = gain * jnp.sqrt(6.0 / (fan_in + fan_out))
    return jax.random.uniform(key, shape, jnp.float32, minval=-a, maxval=a)


def init_value_network(key, num_inputs, hidden_dim):
    k1, k2, k3 = jax.random.split(key, 3)
    return {
        # PyTorch Linear weight layout (out_features, in_features) — exactly what the
        # batch-on-lanes kernel consumes; biases stored as columns for broadcasting.
        "w1": _xavier_uniform(k1, (hidden_dim, num_inputs), num_inputs, hidden_dim),
        "b1": jnp.zeros((hidden_dim, 1), jnp.float32),
        "w2": _xavier_uniform(k2, (hidden_dim, hidden_dim), hidden_dim, hidden_dim),
        "b2": jnp.zeros((hidden_dim, 1), jnp.float32),
        "w3": _xavier_uniform(k3, (hidden_dim, 1), hidden_dim, 1),  # linear3.weight.T
        "b3": jnp.zeros((1, 1), jnp.float32),
    }


if __name__ == "__main__":
    key = jax.random.PRNGKey(0)
    k_state, k_params = jax.random.split(key)

    batch, num_inputs, hidden_dim = 600, 16, 32
    state = jax.random.normal(k_state, (batch, num_inputs), jnp.float32)
    params = init_value_network(k_params, num_inputs, hidden_dim)

    # Pure-JAX reference (same semantics as the PyTorch forward).
    h1 = jnp.maximum(state @ params["w1"].T + params["b1"].T, 0.0)
    h2 = jnp.maximum(h1 @ params["w2"].T + params["b2"].T, 0.0)
    ref = h2 @ params["w3"] + params["b3"]

    # 1) Auto defaults: auto tile_b (MXU-aligned, v7x-aware), bf16 on v6e/v7x / f32 on v5e.
    out_auto = jax.block_until_ready(value_network_forward(state, params))
    auto_cd = _resolve_compute_dtype(None)
    bf16 = jnp.dtype(auto_cd) == jnp.dtype(jnp.bfloat16)
    atol, rtol = (0.25, 0.05) if bf16 else (1e-4, 1e-4)   # f32 accumulation kept; bf16 is rounding only
    assert out_auto.shape == (batch, 1)
    assert jnp.allclose(out_auto, ref, atol=atol, rtol=rtol), float(jnp.max(jnp.abs(out_auto - ref)))

    # 2) Explicit f32 + small tile: exercises the multi-tile grid with ragged padding, tight check.
    out_f32 = jax.block_until_ready(
        value_network_forward(state, params, tile_b=256, compute_dtype=jnp.float32))
    assert jnp.allclose(out_f32, ref, atol=1e-4, rtol=1e-4), float(jnp.max(jnp.abs(out_f32 - ref)))

    # 3) Pre-transposed state path (wrapper skips the pad+transpose HBM pass of the batch axis).
    out_t = jax.block_until_ready(
        value_network_forward(state.T, params, state_is_transposed=True))
    assert jnp.allclose(out_t, ref, atol=atol, rtol=rtol), float(jnp.max(jnp.abs(out_t - ref)))

    print("KERNEL_OK")
</pallas_src>

<mosaic_0001>
module attributes {stable_mosaic.version = 11 : i64} {
  func.func @_value_network_kernel(%arg0: i32, %arg1: memref<16x768xf32, #tpu.memory_space<vmem>>, %arg2: memref<32x16xf32, #tpu.memory_space<vmem>>, %arg3: memref<32x1xf32, #tpu.memory_space<vmem>>, %arg4: memref<32x32xf32, #tpu.memory_space<vmem>>, %arg5: memref<32x1xf32, #tpu.memory_space<vmem>>, %arg6: memref<32x1xf32, #tpu.memory_space<vmem>>, %arg7: memref<1x1xf32, #tpu.memory_space<vmem>>, %arg8: memref<1x768xf32, #tpu.memory_space<vmem>>) attributes {dimension_semantics = [#tpu.dimension_semantics<parallel>], iteration_bounds = array<i64: 1>, scalar_prefetch = 0 : i64, scratch_operands = 0 : i64, tpu.core_type = #tpu.core_type<tc>, window_params = [{transform_indices = @transform_0, window_bounds = array<i64: 16, 768>}, {pipeline_mode = #tpu.pipeline_mode<synchronous>, transform_indices = @transform_1, window_bounds = array<i64: 32, 16>}, {pipeline_mode = #tpu.pipeline_mode<synchronous>, transform_indices = @transform_2, window_bounds = array<i64: 32, 1>}, {pipeline_mode = #tpu.pipeline_mode<synchronous>, transform_indices = @transform_3, window_bounds = array<i64: 32, 32>}, {pipeline_mode = #tpu.pipeline_mode<synchronous>, transform_indices = @transform_4, window_bounds = array<i64: 32, 1>}, {pipeline_mode = #tpu.pipeline_mode<synchronous>, transform_indices = @transform_5, window_bounds = array<i64: 32, 1>}, {pipeline_mode = #tpu.pipeline_mode<synchronous>, transform_indices = @transform_6, window_bounds = array<i64: 1, 1>}, {transform_indices = @transform_7, window_bounds = array<i64: 1, 768>}]} {
    %c0 = arith.constant 0 : index
    %c0_0 = arith.constant 0 : index
    %0 = vector.load %arg1[%c0, %c0_0] : memref<16x768xf32, #tpu.memory_space<vmem>>, vector<16x768xf32>
    %c0_1 = arith.constant 0 : index
    %c0_2 = arith.constant 0 : index
    %1 = vector.load %arg2[%c0_1, %c0_2] : memref<32x16xf32, #tpu.memory_space<vmem>>, vector<32x16xf32>
    %cst = arith.constant dense<0.000000e+00> : vector<32x768xf32>
    %2 = tpu.matmul %1, %0, %cst {dimension_numbers = #tpu.dot_dimension_numbers<[1], [0], [0], [1], [0, 0, 1, 1], [], []>} : vector<32x16xf32>, vector<16x768xf32>, vector<32x768xf32> -> vector<32x768xf32>
    %c0_3 = arith.constant 0 : index
    %c0_4 = arith.constant 0 : index
    %3 = vector.load %arg3[%c0_3, %c0_4] : memref<32x1xf32, #tpu.memory_space<vmem>>, vector<32x1xf32>
    %4 = vector.broadcast %3 : vector<32x1xf32> to vector<32x768xf32>
    %5 = arith.addf %2, %4 : vector<32x768xf32>
    %cst_5 = arith.constant 0.000000e+00 : f32
    %6 = vector.broadcast %cst_5 : f32 to vector<32x768xf32>
    %7 = arith.maximumf %5, %6 : vector<32x768xf32>
    %c0_6 = arith.constant 0 : index
    %c0_7 = arith.constant 0 : index
    %8 = vector.load %arg4[%c0_6, %c0_7] : memref<32x32xf32, #tpu.memory_space<vmem>>, vector<32x32xf32>
    %cst_8 = arith.constant dense<0.000000e+00> : vector<32x768xf32>
    %9 = tpu.matmul %8, %7, %cst_8 {dimension_numbers = #tpu.dot_dimension_numbers<[1], [0], [0], [1], [0, 0, 1, 1], [], []>} : vector<32x32xf32>, vector<32x768xf32>, vector<32x768xf32> -> vector<32x768xf32>
    %c0_9 = arith.constant 0 : index
    %c0_10 = arith.constant 0 : index
    %10 = vector.load %arg5[%c0_9, %c0_10] : memref<32x1xf32, #tpu.memory_space<vmem>>, vector<32x1xf32>
    %11 = vector.broadcast %10 : vector<32x1xf32> to vector<32x768xf32>
    %12 = arith.addf %9, %11 : vector<32x768xf32>
    %cst_11 = arith.constant 0.000000e+00 : f32
    %13 = vector.broadcast %cst_11 : f32 to vector<32x768xf32>
    %14 = arith.maximumf %12, %13 : vector<32x768xf32>
    %c0_12 = arith.constant 0 : index
    %c0_13 = arith.constant 0 : index
    %15 = vector.load %arg6[%c0_12, %c0_13] : memref<32x1xf32, #tpu.memory_space<vmem>>, vector<32x1xf32>
    %16 = vector.broadcast %15 : vector<32x1xf32> to vector<32x768xf32>
    %17 = arith.mulf %14, %16 : vector<32x768xf32>
    %cst_14 = arith.constant dense<0.000000e+00> : vector<768xf32>
    %18 = vector.multi_reduction <add>, %17, %cst_14 [0] : vector<32x768xf32> to vector<768xf32>
    %19 = vector.shape_cast %18 : vector<768xf32> to vector<1x768xf32>
    %c0_15 = arith.constant 0 : index
    %c0_16 = arith.constant 0 : index
    %20 = vector.load %arg7[%c0_15, %c0_16] : memref<1x1xf32, #tpu.memory_space<vmem>>, vector<1x1xf32>
    %21 = vector.broadcast %20 : vector<1x1xf32> to vector<1x768xf32>
    %22 = arith.addf %19, %21 : vector<1x768xf32>
    %c0_17 = arith.constant 0 : index
    %c0_18 = arith.constant 0 : index
    %23 = vector.load %arg8[%c0_17, %c0_18] : memref<1x768xf32, #tpu.memory_space<vmem>>, vector<1x768xf32>
    tpu.vector_store %arg8[%c0_17, %c0_18], %22 {strides = array<i32>} : memref<1x768xf32, #tpu.memory_space<vmem>>, vector<1x768xf32>,
    return
  }
  func.func @transform_0(%arg0: i32) -> (i32, i32) {
    %c0_i32 = arith.constant 0 : i32
    %c0_i32_0 = arith.constant 0 : i32
    return %c0_i32, %arg0 : i32, i32
  }
  func.func @transform_1(%arg0: i32) -> (i32, i32) {
    %c0_i32 = arith.constant 0 : i32
    %c0_i32_0 = arith.constant 0 : i32
    %c0_i32_1 = arith.constant 0 : i32
    return %c0_i32, %c0_i32_0 : i32, i32
  }
  func.func @transform_2(%arg0: i32) -> (i32, i32) {
    %c0_i32 = arith.constant 0 : i32
    %c0_i32_0 = arith.constant 0 : i32
    %c0_i32_1 = arith.constant 0 : i32
    return %c0_i32, %c0_i32_0 : i32, i32
  }
  func.func @transform_3(%arg0: i32) -> (i32, i32) {
    %c0_i32 = arith.constant 0 : i32
    %c0_i32_0 = arith.constant 0 : i32
    %c0_i32_1 = arith.constant 0 : i32
    return %c0_i32, %c0_i32_0 : i32, i32
  }
  func.func @transform_4(%arg0: i32) -> (i32, i32) {
    %c0_i32 = arith.constant 0 : i32
    %c0_i32_0 = arith.constant 0 : i32
    %c0_i32_1 = arith.constant 0 : i32
    return %c0_i32, %c0_i32_0 : i32, i32
  }
  func.func @transform_5(%arg0: i32) -> (i32, i32) {
    %c0_i32 = arith.constant 0 : i32
    %c0_i32_0 = arith.constant 0 : i32
    %c0_i32_1 = arith.constant 0 : i32
    return %c0_i32, %c0_i32_0 : i32, i32
  }
  func.func @transform_6(%arg0: i32) -> (i32, i32) {
    %c0_i32 = arith.constant 0 : i32
    %c0_i32_0 = arith.constant 0 : i32
    %c0_i32_1 = arith.constant 0 : i32
    return %c0_i32, %c0_i32_0 : i32, i32
  }
  func.func @transform_7(%arg0: i32) -> (i32, i32) {
    %c0_i32 = arith.constant 0 : i32
    %c0_i32_0 = arith.constant 0 : i32
    return %c0_i32, %arg0 : i32, i32
  }
}

</mosaic_0001>

<llo_original>
// kernel: tpu_custom_call.1
$region0: #{tpu_custom_call.1}
  #allocation0 [shape = 'u32[]', space=smem, size = 0x4, offset = 0x4, fixed_abs, tag = 'smem constant byte address 0x4 - core index']
  #allocation1 [shape = 'u32[144,128]{1,0:T(1,128)}', space=vmem, size = 0x12000, scoped, tag = 'internal scratch']
  #allocation2 [shape = 'f32[1,1]{1,0:T(1,128)S(1)}', space=vmem, size = 0x200, scoped, tag = 'scoped memory for tpu_custom_call.1']
  %s0 = inlined_call_operand.vmem [shape: f32[16,768], index: 0, kind: input, shape index: {}]
  %s1 = inlined_call_operand.vmem [shape: f32[32,16], index: 1, kind: input, shape index: {}]
  %s2 = inlined_call_operand.vmem [shape: f32[32,1], index: 2, kind: input, shape index: {}]
  %s3 = inlined_call_operand.vmem [shape: f32[32,32], index: 3, kind: input, shape index: {}]
  %s4 = inlined_call_operand.vmem [shape: f32[32,1], index: 4, kind: input, shape index: {}]
  %s5 = inlined_call_operand.vmem [shape: f32[32,1], index: 5, kind: input, shape index: {}]
  %s6 = inlined_call_operand.<no memory space> [shape: f32[1,1], index: 6, kind: input, shape index: {}]
  %s7 = inlined_call_operand.hbm [shape: f32[1,768], index: 7, kind: output, shape index: {}]
  %s8 = sld [smem:[#allocation0]]
  $region38: #{tpu_custom_call.1} parent=0
    _
  %s10 = ssub.s32 1, %s8
  %s11 = scalar_select 0, %s10, %s8
  %v12 = vstv %s6
  %13 = vst [vmem:[#allocation2] sm:$0x1] %v12
  $region1: #{tpu_custom_call.1} parent=0
    #allocation3 [shape = 'u8[3072]{0}', space=vmem, size = 0xc00, scoped, tag = 'output window, operand 0, single buffered']
    #allocation4 [shape = 's32[1]{0}', space=sflag, size = 0x4, scoped, tag = 'scoped memory for tpu_custom_call.1']
    %14 = vsyncpa [#allocation4], 0
    // Predicated region
    $region2: #{tpu_custom_call.1} parent=1 // pred_check
      _
    $region3: #{tpu_custom_call.1} parent=1 // pred_check_branch
      %16 = sbr.rel (0) target = $region5
    $region4: #{tpu_custom_call.1} parent=1 // pred_region
      _
    $region5: #{tpu_custom_call.1} parent=1 // pred_fallthru
      _
    // Predicated region
    $region6: #{tpu_custom_call.1} parent=1 // pred_check
      _
    $region7: #{tpu_custom_call.1} parent=1 // pred_check_branch
      %18 = sbr.rel (0) target = $region9
    $region8: #{tpu_custom_call.1} parent=1 // pred_region
      _
    $region9: #{tpu_custom_call.1} parent=1 // pred_fallthru
      _
    // Predicated region
    $region10: #{tpu_custom_call.1} parent=1 // pred_check
      _
    $region11: #{tpu_custom_call.1} parent=1 // pred_check_branch
      %20 = sbr.rel (0) target = $region13
    $region12: #{tpu_custom_call.1} parent=1 // pred_region
      _
    $region13: #{tpu_custom_call.1} parent=1 // pred_fallthru
      _
    // Predicated region
    $region14: #{tpu_custom_call.1} parent=1 // pred_check
      _
    $region15: #{tpu_custom_call.1} parent=1 // pred_check_branch
      %22 = sbr.rel (0) target = $region17
    $region16: #{tpu_custom_call.1} parent=1 // pred_region
      _
    $region17: #{tpu_custom_call.1} parent=1 // pred_fallthru
      _
    // Predicated region
    $region18: #{tpu_custom_call.1} parent=1 // pred_check
      _
    $region19: #{tpu_custom_call.1} parent=1 // pred_check_branch
      %24 = sbr.rel (0) target = $region21
    $region20: #{tpu_custom_call.1} parent=1 // pred_region
      _
    $region21: #{tpu_custom_call.1} parent=1 // pred_fallthru
      _
    // Predicated region
    $region22: #{tpu_custom_call.1} parent=1 // pred_check
      _
    $region23: #{tpu_custom_call.1} parent=1 // pred_check_branch
      %26 = sbr.rel (0) target = $region25
    $region24: #{tpu_custom_call.1} parent=1 // pred_region
      _
    $region25: #{tpu_custom_call.1} parent=1 // pred_fallthru
      _
    // Predicated region
    $region26: #{tpu_custom_call.1} parent=1 // pred_check
      _
    $region27: #{tpu_custom_call.1} parent=1 // pred_check_branch
      %28 = sbr.rel (0) target = $region29
    $region28: #{tpu_custom_call.1} parent=1 // pred_region
      _
    $region29: #{tpu_custom_call.1} parent=1 // pred_fallthru
      _
    %v29 = vld [vmem:[%s0] sm:$0xff]
    %v30 = vld [vmem:[%s0 + $0x8] sm:$0xff]
    %v31 = vld [vmem:[%s0 + $0x10] sm:$0xff]
    %v32 = vld [vmem:[%s0 + $0x18] sm:$0xff]
    %v33 = vld [vmem:[%s0 + $0x20] sm:$0xff]
    %v34 = vld [vmem:[%s0 + $0x28] sm:$0xff]
    %v35 = vld [vmem:[%s0 + $0x30] sm:$0xff]
    %v36 = vld [vmem:[%s0 + $0x38] sm:$0xff]
    %v37 = vld [vmem:[%s0 + $0x40] sm:$0xff]
    %v38 = vld [vmem:[%s0 + $0x48] sm:$0xff]
    %v39 = vld [vmem:[%s0 + $0x50] sm:$0xff]
    %v40 = vld [vmem:[%s0 + $0x58] sm:$0xff]
    %v41 = vld [vmem:[%s1] sm:$0xff]
    %v42 = vld [vmem:[%s1 + $0x8] sm:$0xff]
    %v43 = vld [vmem:[%s1 + $0x10] sm:$0xff]
    %v44 = vld [vmem:[%s1 + $0x18] sm:$0xff]
    %v45 = vld [vmem:[%s2] sm:$0xff]
    %v46 = vld [vmem:[%s2 + $0x8] sm:$0xff]
    %v47 = vld [vmem:[%s2 + $0x10] sm:$0xff]
    %v48 = vld [vmem:[%s2 + $0x18] sm:$0xff]
    %50 = vset.pattern.permute.xlu0 0
    %51 = vperm.xlu0 %50, %v45
    %v52 = vpop.permute.xlu0 %51
    %55 = vset.pattern.permute.xlu0 0
    %56 = vperm.xlu0 %55, %v46
    %v57 = vpop.permute.xlu0 %56
    %60 = vset.pattern.permute.xlu0 0
    %61 = vperm.xlu0 %60, %v47
    %v62 = vpop.permute.xlu0 %61
    %65 = vset.pattern.permute.xlu0 0
    %66 = vperm.xlu0 %65, %v48
    %v67 = vpop.permute.xlu0 %66
    %vm69 = vcmask 130048
    %v71 = vsel %vm69, %v41, 0
    %v74 = vsel %vm69, %v42, 0
    %v77 = vsel %vm69, %v43, 0
    %v80 = vsel %vm69, %v44, 0
    %82 = vmatprep.subr.mxu0 %v30
    %83 = vmatpush1.msra.mxu0 %v29
    %84 = vmatprep.subr.mxu0 %v36
    %85 = vmatpush1.msra.mxu0 %v35
    %86 = vmatprep.subr.mxu0 0.0
    %87 = vmatpush1.msra.mxu0 0.0
    %88 = vmatprep.subr.mxu0 0.0
    %89 = vmatpush1.msra.mxu0 0.0
    %90 = vmatprep.subr.mxu0 0.0
    %91 = vmatpush1.msra.mxu0 0.0
    %92 = vmatprep.subr.mxu0 0.0
    %93 = vmatpush1.msra.mxu0 0.0
    %94 = vmatprep.subr.mxu0 0.0
    %95 = vmatpush1.msra.mxu0 0.0
    %96 = vmatprep.subr.mxu0 0.0
    %97 = vmatpush1.msra.mxu0 0.0
    %98 = vmatprep.subr.mxu0 0.0
    %99 = vmatpush1.msra.mxu0 0.0
    %100 = vmatprep.subr.mxu0 0.0
    %101 = vmatpush1.msra.mxu0 0.0
    %102 = vmatprep.subr.mxu0 0.0
    %103 = vmatpush1.msra.mxu0 0.0
    %104 = vmatprep.subr.mxu0 0.0
    %105 = vmatpush1.msra.mxu0 0.0
    %106 = vmatprep.subr.mxu0 0.0
    %107 = vmatpush1.msra.mxu0 0.0
    %108 = vmatprep.subr.mxu0 0.0
    %109 = vmatpush1.msra.mxu0 0.0
    %110 = vmatprep.subr.mxu0 0.0
    %111 = vmatpush1.msra.mxu0 0.0
    %112 = vmatprep.subr.mxu0 0.0
    %113 = vmatpush1.msra.mxu0 0.0
    %114 = vmatprep.subr.mxu0 0.0
    %115 = vmatpush1.msra.mxu0 0.0
    %116 = vmatprep.subr.mxu0 0.0
    %117 = vmatpush1.msra.mxu0 0.0
    %118 = vmatprep.subr.mxu0 0.0
    %119 = vmatpush1.msra.mxu0 0.0
    %120 = vmatprep.subr.mxu0 0.0
    %121 = vmatpush1.msra.mxu0 0.0
    %122 = vmatprep.subr.mxu0 0.0
    %123 = vmatpush1.msra.mxu0 0.0
    %124 = vmatprep.subr.mxu0 0.0
    %125 = vmatpush1.msra.mxu0 0.0
    %126 = vmatprep.subr.mxu0 0.0
    %127 = vmatpush1.msra.mxu0 0.0
    %128 = vmatprep.subr.mxu0 0.0
    %129 = vmatpush1.msra.mxu0 0.0
    %130 = vmatprep.subr.mxu0 0.0
    %131 = vmatpush1.msra.mxu0 0.0
    %132 = vmatprep.subr.mxu0 0.0
    %133 = vmatpush1.msra.mxu0 0.0
    %134 = vmatprep.subr.mxu0 0.0
    %135 = vmatpush1.msra.mxu0 0.0
    %136 = vmatprep.subr.mxu0 0.0
    %137 = vmatpush1.msra.mxu0 0.0
    %138 = vmatprep.subr.mxu0 0.0
    %139 = vmatpush1.msra.mxu0 0.0
    %140 = vmatprep.subr.mxu0 0.0
    %141 = vmatpush1.msra.mxu0 0.0
    %142 = vmatprep.subr.mxu0 0.0
    %143 = vmatpush1.msra.mxu0 0.0
    %144 = vmatprep.subr.mxu0 0.0
    %145 = vmatpush1.msra.mxu0 0.0
    %146 = vmatprep.mubr.f32.mxu0 0.0
    %147 = vmatmul.mubr.f32.gmra.mrb[0].mxu0 %v71
    %v148 = vpop.f32.mrb[0].mxu0
    %v149 = vadd.f32 %v52, %v148
    %v150 = vpop.f32.mrb[0].mxu0
    %v151 = vadd.f32 %v52, %v150
    %152 = vmatprep.mubr.f32.mxu0 0.0
    %153 = vmatmul.mubr.f32.gmra.mrb[0].mxu0 %v74
    %v154 = vpop.f32.mrb[0].mxu0
    %v155 = vadd.f32 %v57, %v154
    %v156 = vpop.f32.mrb[0].mxu0
    %v157 = vadd.f32 %v57, %v156
    %158 = vmatprep.mubr.f32.mxu0 0.0
    %159 = vmatmul.mubr.f32.gmra.mrb[0].mxu0 %v77
    %v160 = vpop.f32.mrb[0].mxu0
    %v161 = vadd.f32 %v62, %v160
    %v162 = vpop.f32.mrb[0].mxu0
    %v163 = vadd.f32 %v62, %v162
    %164 = vmatprep.mubr.f32.mxu0 0.0
    %165 = vmatmul.mubr.f32.gmra.mrb[0].mxu0 %v80
    %v166 = vpop.f32.mrb[0].mxu0
    %v167 = vadd.f32 %v67, %v166
    %v168 = vpop.f32.mrb[0].mxu0
    %v169 = vadd.f32 %v67, %v168
    %170 = vdwg.mxu0
    %171 = vmatprep.subr.mxu0 %v32
    %172 = vmatpush1.msra.mxu0 %v31
    %173 = vmatprep.subr.mxu0 %v38
    %174 = vmatpush1.msra.mxu0 %v37
    %175 = vmatprep.subr.mxu0 0.0
    %176 = vmatpush1.msra.mxu0 0.0
    %177 = vmatprep.subr.mxu0 0.0
    %178 = vmatpush1.msra.mxu0 0.0
    %179 = vmatprep.subr.mxu0 0.0
    %180 = vmatpush1.msra.mxu0 0.0
    %181 = vmatprep.subr.mxu0 0.0
    %182 = vmatpush1.msra.mxu0 0.0
    %183 = vmatprep.subr.mxu0 0.0
    %184 = vmatpush1.msra.mxu0 0.0
    %185 = vmatprep.subr.mxu0 0.0
    %186 = vmatpush1.msra.mxu0 0.0
    %187 = vmatprep.subr.mxu0 0.0
    %188 = vmatpush1.msra.mxu0 0.0
    %189 = vmatprep.subr.mxu0 0.0
    %190 = vmatpush1.msra.mxu0 0.0
    %191 = vmatprep.subr.mxu0 0.0
    %192 = vmatpush1.msra.mxu0 0.0
    %193 = vmatprep.subr.mxu0 0.0
    %194 = vmatpush1.msra.mxu0 0.0
    %195 = vmatprep.subr.mxu0 0.0
    %196 = vmatpush1.msra.mxu0 0.0
    %197 = vmatprep.subr.mxu0 0.0
    %198 = vmatpush1.msra.mxu0 0.0
    %199 = vmatprep.subr.mxu0 0.0
    %200 = vmatpush1.msra.mxu0 0.0
    %201 = vmatprep.subr.mxu0 0.0
    %202 = vmatpush1.msra.mxu0 0.0
    %203 = vmatprep.subr.mxu0 0.0
    %204 = vmatpush1.msra.mxu0 0.0
    %205 = vmatprep.subr.mxu0 0.0
    %206 = vmatpush1.msra.mxu0 0.0
    %207 = vmatprep.subr.mxu0 0.0
    %208 = vmatpush1.msra.mxu0 0.0
    %209 = vmatprep.subr.mxu0 0.0
    %210 = vmatpush1.msra.mxu0 0.0
    %211 = vmatprep.subr.mxu0 0.0
    %212 = vmatpush1.msra.mxu0 0.0
    %213 = vmatprep.subr.mxu0 0.0
    %214 = vmatpush1.msra.mxu0 0.0
    %215 = vmatprep.subr.mxu0 0.0
    %216 = vmatpush1.msra.mxu0 0.0
    %217 = vmatprep.subr.mxu0 0.0
    %218 = vmatpush1.msra.mxu0 0.0
    %219 = vmatprep.subr.mxu0 0.0
    %220 = vmatpush1.msra.mxu0 0.0
    %221 = vmatprep.subr.mxu0 0.0
    %222 = vmatpush1.msra.mxu0 0.0
    %223 = vmatprep.subr.mxu0 0.0
    %224 = vmatpush1.msra.mxu0 0.0
    %225 = vmatprep.subr.mxu0 0.0
    %226 = vmatpush1.msra.mxu0 0.0
    %227 = vmatprep.subr.mxu0 0.0
    %228 = vmatpush1.msra.mxu0 0.0
    %229 = vmatprep.subr.mxu0 0.0
    %230 = vmatpush1.msra.mxu0 0.0
    %231 = vmatprep.subr.mxu0 0.0
    %232 = vmatpush1.msra.mxu0 0.0
    %233 = vmatprep.subr.mxu0 0.0
    %234 = vmatpush1.msra.mxu0 0.0
    %235 = vmatprep.mubr.f32.mxu0 0.0
    %236 = vmatmul.mubr.f32.gmra.mrb[0].mxu0 %v71
    %v237 = vpop.f32.mrb[0].mxu0
    %v238 = vadd.f32 %v52, %v237
    %v239 = vpop.f32.mrb[0].mxu0
    %v240 = vadd.f32 %v52, %v239
    %241 = vmatprep.mubr.f32.mxu0 0.0
    %242 = vmatmul.mubr.f32.gmra.mrb[0].mxu0 %v74
    %v243 = vpop.f32.mrb[0].mxu0
    %v244 = vadd.f32 %v57, %v243
    %v245 = vpop.f32.mrb[0].mxu0
    %v246 = vadd.f32 %v57, %v245
    %247 = vmatprep.mubr.f32.mxu0 0.0
    %248 = vmatmul.mubr.f32.gmra.mrb[0].mxu0 %v77
    %v249 = vpop.f32.mrb[0].mxu0
    %v250 = vadd.f32 %v62, %v249
    %v251 = vpop.f32.mrb[0].mxu0
    %v252 = vadd.f32 %v62, %v251
    %253 = vmatprep.mubr.f32.mxu0 0.0
    %254 = vmatmul.mubr.f32.gmra.mrb[0].mxu0 %v80
    %v255 = vpop.f32.mrb[0].mxu0
    %v256 = vadd.f32 %v67, %v255
    %v257 = vpop.f32.mrb[0].mxu0
    %v258 = vadd.f32 %v67, %v257
    %259 = vdwg.mxu0
    %260 = vmatprep.subr.mxu0 %v34
    %261 = vmatpush1.msra.mxu0 %v33
    %262 = vmatprep.subr.mxu0 %v40
    %263 = vmatpush1.msra.mxu0 %v39
    %264 = vmatprep.subr.mxu0 0.0
    %265 = vmatpush1.msra.mxu0 0.0
    %266 = vmatprep.subr.mxu0 0.0
    %267 = vmatpush1.msra.mxu0 0.0
    %268 = vmatprep.subr.mxu0 0.0
    %269 = vmatpush1.msra.mxu0 0.0
    %270 = vmatprep.subr.mxu0 0.0
    %271 = vmatpush1.msra.mxu0 0.0
    %272 = vmatprep.subr.mxu0 0.0
    %273 = vmatpush1.msra.mxu0 0.0
    %274 = vmatprep.subr.mxu0 0.0
    %275 = vmatpush1.msra.mxu0 0.0
    %276 = vmatprep.subr.mxu0 0.0
    %277 = vmatpush1.msra.mxu0 0.0
    %278 = vmatprep.subr.mxu0 0.0
    %279 = vmatpush1.msra.mxu0 0.0
    %280 = vmatprep.subr.mxu0 0.0
    %281 = vmatpush1.msra.mxu0 0.0
    %282 = vmatprep.subr.mxu0 0.0
    %283 = vmatpush1.msra.mxu0 0.0
    %284 = vmatprep.subr.mxu0 0.0
    %285 = vmatpush1.msra.mxu0 0.0
    %286 = vmatprep.subr.mxu0 0.0
    %287 = vmatpush1.msra.mxu0 0.0
    %288 = vmatprep.subr.mxu0 0.0
    %289 = vmatpush1.msra.mxu0 0.0
    %290 = vmatprep.subr.mxu0 0.0
    %291 = vmatpush1.msra.mxu0 0.0
    %292 = vmatprep.subr.mxu0 0.0
    %293 = vmatpush1.msra.mxu0 0.0
    %294 = vmatprep.subr.mxu0 0.0
    %295 = vmatpush1.msra.mxu0 0.0
    %296 = vmatprep.subr.mxu0 0.0
    %297 = vmatpush1.msra.mxu0 0.0
    %298 = vmatprep.subr.mxu0 0.0
    %299 = vmatpush1.msra.mxu0 0.0
    %300 = vmatprep.subr.mxu0 0.0
    %301 = vmatpush1.msra.mxu0 0.0
    %302 = vmatprep.subr.mxu0 0.0
    %303 = vmatpush1.msra.mxu0 0.0
    %304 = vmatprep.subr.mxu0 0.0
    %305 = vmatpush1.msra.mxu0 0.0
    %306 = vmatprep.subr.mxu0 0.0
    %307 = vmatpush1.msra.mxu0 0.0
    %308 = vmatprep.subr.mxu0 0.0
    %309 = vmatpush1.msra.mxu0 0.0
    %310 = vmatprep.subr.mxu0 0.0
    %311 = vmatpush1.msra.mxu0 0.0
    %312 = vmatprep.subr.mxu0 0.0
    %313 = vmatpush1.msra.mxu0 0.0
    %314 = vmatprep.subr.mxu0 0.0
    %315 = vmatpush1.msra.mxu0 0.0
    %316 = vmatprep.subr.mxu0 0.0
    %317 = vmatpush1.msra.mxu0 0.0
    %318 = vmatprep.subr.mxu0 0.0
    %319 = vmatpush1.msra.mxu0 0.0
    %320 = vmatprep.subr.mxu0 0.0
    %321 = vmatpush1.msra.mxu0 0.0
    %322 = vmatprep.subr.mxu0 0.0
    %323 = vmatpush1.msra.mxu0 0.0
    %324 = vmatprep.mubr.f32.mxu0 0.0
    %325 = vmatmul.mubr.f32.gmra.mrb[0].mxu0 %v71
    %v326 = vpop.f32.mrb[0].mxu0
    %v327 = vadd.f32 %v52, %v326
    %v328 = vpop.f32.mrb[0].mxu0
    %v329 = vadd.f32 %v52, %v328
    %330 = vmatprep.mubr.f32.mxu0 0.0
    %331 = vmatmul.mubr.f32.gmra.mrb[0].mxu0 %v74
    %v332 = vpop.f32.mrb[0].mxu0
    %v333 = vadd.f32 %v57, %v332
    %v334 = vpop.f32.mrb[0].mxu0
    %v335 = vadd.f32 %v57, %v334
    %336 = vmatprep.mubr.f32.mxu0 0.0
    %337 = vmatmul.mubr.f32.gmra.mrb[0].mxu0 %v77
    %v338 = vpop.f32.mrb[0].mxu0
    %v339 = vadd.f32 %v62, %v338
    %v340 = vpop.f32.mrb[0].mxu0
    %v341 = vadd.f32 %v62, %v340
    %342 = vmatprep.mubr.f32.mxu0 0.0
    %343 = vmatmul.mubr.f32.gmra.mrb[0].mxu0 %v80
    %v344 = vpop.f32.mrb[0].mxu0
    %v345 = vadd.f32 %v67, %v344
    %v346 = vpop.f32.mrb[0].mxu0
    %v347 = vadd.f32 %v67, %v346
    %348 = vdwg.mxu0
    %v349 = vmax.f32 %v149, 0.0
    %v350 = vmax.f32 %v151, 0.0
    %v351 = vmax.f32 %v238, 0.0
    %v352 = vmax.f32 %v240, 0.0
    %v353 = vmax.f32 %v327, 0.0
    %v354 = vmax.f32 %v329, 0.0
    %v355 = vmax.f32 %v155, 0.0
    %v356 = vmax.f32 %v157, 0.0
    %v357 = vmax.f32 %v244, 0.0
    %v358 = vmax.f32 %v246, 0.0
    %v359 = vmax.f32 %v333, 0.0
    %v360 = vmax.f32 %v335, 0.0
    %v361 = vmax.f32 %v161, 0.0
    %v362 = vmax.f32 %v163, 0.0
    %v363 = vmax.f32 %v250, 0.0
    %v364 = vmax.f32 %v252, 0.0
    %v365 = vmax.f32 %v339, 0.0
    %v366 = vmax.f32 %v341, 0.0
    %v367 = vmax.f32 %v167, 0.0
    %v368 = vmax.f32 %v169, 0.0
    %v369 = vmax.f32 %v256, 0.0
    %v370 = vmax.f32 %v258, 0.0
    %v371 = vmax.f32 %v345, 0.0
    %v372 = vmax.f32 %v347, 0.0
    %v373 = vld [vmem:[%s3] sm:$0xff]
    %v374 = vld [vmem:[%s3 + $0x8] sm:$0xff]
    %v375 = vld [vmem:[%s3 + $0x10] sm:$0xff]
    %v376 = vld [vmem:[%s3 + $0x18] sm:$0xff]
    %v377 = vld [vmem:[%s4] sm:$0xff]
    %v378 = vld [vmem:[%s4 + $0x8] sm:$0xff]
    %v379 = vld [vmem:[%s4 + $0x10] sm:$0xff]
    %v380 = vld [vmem:[%s4 + $0x18] sm:$0xff]
    %382 = vset.pattern.permute.xlu0 0
    %383 = vperm.xlu0 %382, %v377
    %v384 = vpop.permute.xlu0 %383
    %387 = vset.pattern.permute.xlu0 0
    %388 = vperm.xlu0 %387, %v378
    %v389 = vpop.permute.xlu0 %388
    %392 = vset.pattern.permute.xlu0 0
    %393 = vperm.xlu0 %392, %v379
    %v394 = vpop.permute.xlu0 %393
    %397 = vset.pattern.permute.xlu0 0
    %398 = vperm.xlu0 %397, %v380
    %v399 = vpop.permute.xlu0 %398
    %vm401 = vcmask 261120
    %v403 = vsel %vm401, %v373, 0
    %v406 = vsel %vm401, %v374, 0
    %v409 = vsel %vm401, %v375, 0
    %v412 = vsel %vm401, %v376, 0
    %414 = vmatprep.subr.mxu0 %v350
    %415 = vmatpush1.msra.mxu0 %v349
    %416 = vmatprep.subr.mxu0 %v356
    %417 = vmatpush1.msra.mxu0 %v355
    %418 = vmatprep.subr.mxu0 %v362
    %419 = vmatpush1.msra.mxu0 %v361
    %420 = vmatprep.subr.mxu0 %v368
    %421 = vmatpush1.msra.mxu0 %v367
    %422 = vmatprep.subr.mxu0 0.0
    %423 = vmatpush1.msra.mxu0 0.0
    %424 = vmatprep.subr.mxu0 0.0
    %425 = vmatpush1.msra.mxu0 0.0
    %426 = vmatprep.subr.mxu0 0.0
    %427 = vmatpush1.msra.mxu0 0.0
    %428 = vmatprep.subr.mxu0 0.0
    %429 = vmatpush1.msra.mxu0 0.0
    %430 = vmatprep.subr.mxu0 0.0
    %431 = vmatpush1.msra.mxu0 0.0
    %432 = vmatprep.subr.mxu0 0.0
    %433 = vmatpush1.msra.mxu0 0.0
    %434 = vmatprep.subr.mxu0 0.0
    %435 = vmatpush1.msra.mxu0 0.0
    %436 = vmatprep.subr.mxu0 0.0
    %437 = vmatpush1.msra.mxu0 0.0
    %438 = vmatprep.subr.mxu0 0.0
    %439 = vmatpush1.msra.mxu0 0.0
    %440 = vmatprep.subr.mxu0 0.0
    %441 = vmatpush1.msra.mxu0 0.0
    %442 = vmatprep.subr.mxu0 0.0
    %443 = vmatpush1.msra.mxu0 0.0
    %444 = vmatprep.subr.mxu0 0.0
    %445 = vmatpush1.msra.mxu0 0.0
    %446 = vmatprep.subr.mxu0 0.0
    %447 = vmatpush1.msra.mxu0 0.0
    %448 = vmatprep.subr.mxu0 0.0
    %449 = vmatpush1.msra.mxu0 0.0
    %450 = vmatprep.subr.mxu0 0.0
    %451 = vmatpush1.msra.mxu0 0.0
    %452 = vmatprep.subr.mxu0 0.0
    %453 = vmatpush1.msra.mxu0 0.0
    %454 = vmatprep.subr.mxu0 0.0
    %455 = vmatpush1.msra.mxu0 0.0
    %456 = vmatprep.subr.mxu0 0.0
    %457 = vmatpush1.msra.mxu0 0.0
    %458 = vmatprep.subr.mxu0 0.0
    %459 = vmatpush1.msra.mxu0 0.0
    %460 = vmatprep.subr.mxu0 0.0
    %461 = vmatpush1.msra.mxu0 0.0
    %462 = vmatprep.subr.mxu0 0.0
    %463 = vmatpush1.msra.mxu0 0.0
    %464 = vmatprep.subr.mxu0 0.0
    %465 = vmatpush1.msra.mxu0 0.0
    %466 = vmatprep.subr.mxu0 0.0
    %467 = vmatpush1.msra.mxu0 0.0
    %468 = vmatprep.subr.mxu0 0.0
    %469 = vmatpush1.msra.mxu0 0.0
    %470 = vmatprep.subr.mxu0 0.0
    %471 = vmatpush1.msra.mxu0 0.0
    %472 = vmatprep.subr.mxu0 0.0
    %473 = vmatpush1.msra.mxu0 0.0
    %474 = vmatprep.subr.mxu0 0.0
    %475 = vmatpush1.msra.mxu0 0.0
    %476 = vmatprep.subr.mxu0 0.0
    %477 = vmatpush1.msra.mxu0 0.0
    %478 = vmatprep.mubr.f32.mxu0 0.0
    %479 = vmatmul.mubr.f32.gmra.mrb[0].mxu0 %v403
    %v480 = vpop.f32.mrb[0].mxu0
    %v481 = vadd.f32 %v384, %v480
    %v482 = vpop.f32.mrb[0].mxu0
    %v483 = vadd.f32 %v384, %v482
    %484 = vmatprep.mubr.f32.mxu0 0.0
    %485 = vmatmul.mubr.f32.gmra.mrb[0].mxu0 %v406
    %v486 = vpop.f32.mrb[0].mxu0
    %v487 = vadd.f32 %v389, %v486
    %v488 = vpop.f32.mrb[0].mxu0
    %v489 = vadd.f32 %v389, %v488
    %490 = vmatprep.mubr.f32.mxu0 0.0
    %491 = vmatmul.mubr.f32.gmra.mrb[0].mxu0 %v409
    %v492 = vpop.f32.mrb[0].mxu0
    %v493 = vadd.f32 %v394, %v492
    %v494 = vpop.f32.mrb[0].mxu0
    %v495 = vadd.f32 %v394, %v494
    %496 = vmatprep.mubr.f32.mxu0 0.0
    %497 = vmatmul.mubr.f32.gmra.mrb[0].mxu0 %v412
    %v498 = vpop.f32.mrb[0].mxu0
    %v499 = vadd.f32 %v399, %v498
    %v500 = vpop.f32.mrb[0].mxu0
    %v501 = vadd.f32 %v399, %v500
    %502 = vdwg.mxu0
    %503 = vmatprep.subr.mxu0 %v352
    %504 = vmatpush1.msra.mxu0 %v351
    %505 = vmatprep.subr.mxu0 %v358
    %506 = vmatpush1.msra.mxu0 %v357
    %507 = vmatprep.subr.mxu0 %v364
    %508 = vmatpush1.msra.mxu0 %v363
    %509 = vmatprep.subr.mxu0 %v370
    %510 = vmatpush1.msra.mxu0 %v369
    %511 = vmatprep.subr.mxu0 0.0
    %512 = vmatpush1.msra.mxu0 0.0
    %513 = vmatprep.subr.mxu0 0.0
    %514 = vmatpush1.msra.mxu0 0.0
    %515 = vmatprep.subr.mxu0 0.0
    %516 = vmatpush1.msra.mxu0 0.0
    %517 = vmatprep.subr.mxu0 0.0
    %518 = vmatpush1.msra.mxu0 0.0
    %519 = vmatprep.subr.mxu0 0.0
    %520 = vmatpush1.msra.mxu0 0.0
    %521 = vmatprep.subr.mxu0 0.0
    %522 = vmatpush1.msra.mxu0 0.0
    %523 = vmatprep.subr.mxu0 0.0
    %524 = vmatpush1.msra.mxu0 0.0
    %525 = vmatprep.subr.mxu0 0.0
    %526 = vmatpush1.msra.mxu0 0.0
    %527 = vmatprep.subr.mxu0 0.0
    %528 = vmatpush1.msra.mxu0 0.0
    %529 = vmatprep.subr.mxu0 0.0
    %530 = vmatpush1.msra.mxu0 0.0
    %531 = vmatprep.subr.mxu0 0.0
    %532 = vmatpush1.msra.mxu0 0.0
    %533 = vmatprep.subr.mxu0 0.0
    %534 = vmatpush1.msra.mxu0 0.0
    %535 = vmatprep.subr.mxu0 0.0
    %536 = vmatpush1.msra.mxu0 0.0
    %537 = vmatprep.subr.mxu0 0.0
    %538 = vmatpush1.msra.mxu0 0.0
    %539 = vmatprep.subr.mxu0 0.0
    %540 = vmatpush1.msra.mxu0 0.0
    %541 = vmatprep.subr.mxu0 0.0
    %542 = vmatpush1.msra.mxu0 0.0
    %543 = vmatprep.subr.mxu0 0.0
    %544 = vmatpush1.msra.mxu0 0.0
    %545 = vmatprep.subr.mxu0 0.0
    %546 = vmatpush1.msra.mxu0 0.0
    %547 = vmatprep.subr.mxu0 0.0
    %548 = vmatpush1.msra.mxu0 0.0
    %549 = vmatprep.subr.mxu0 0.0
    %550 = vmatpush1.msra.mxu0 0.0
    %551 = vmatprep.subr.mxu0 0.0
    %552 = vmatpush1.msra.mxu0 0.0
    %553 = vmatprep.subr.mxu0 0.0
    %554 = vmatpush1.msra.mxu0 0.0
    %555 = vmatprep.subr.mxu0 0.0
    %556 = vmatpush1.msra.mxu0 0.0
    %557 = vmatprep.subr.mxu0 0.0
    %558 = vmatpush1.msra.mxu0 0.0
    %559 = vmatprep.subr.mxu0 0.0
    %560 = vmatpush1.msra.mxu0 0.0
    %561 = vmatprep.subr.mxu0 0.0
    %562 = vmatpush1.msra.mxu0 0.0
    %563 = vmatprep.subr.mxu0 0.0
    %564 = vmatpush1.msra.mxu0 0.0
    %565 = vmatprep.subr.mxu0 0.0
    %566 = vmatpush1.msra.mxu0 0.0
    %567 = vmatprep.mubr.f32.mxu0 0.0
    %568 = vmatmul.mubr.f32.gmra.mrb[0].mxu0 %v403
    %v569 = vpop.f32.mrb[0].mxu0
    %v570 = vadd.f32 %v384, %v569
    %v571 = vpop.f32.mrb[0].mxu0
    %v572 = vadd.f32 %v384, %v571
    %573 = vmatprep.mubr.f32.mxu0 0.0
    %574 = vmatmul.mubr.f32.gmra.mrb[0].mxu0 %v406
    %v575 = vpop.f32.mrb[0].mxu0
    %v576 = vadd.f32 %v389, %v575
    %v577 = vpop.f32.mrb[0].mxu0
    %v578 = vadd.f32 %v389, %v577
    %579 = vmatprep.mubr.f32.mxu0 0.0
    %580 = vmatmul.mubr.f32.gmra.mrb[0].mxu0 %v409
    %v581 = vpop.f32.mrb[0].mxu0
    %v582 = vadd.f32 %v394, %v581
    %v583 = vpop.f32.mrb[0].mxu0
    %v584 = vadd.f32 %v394, %v583
    %585 = vmatprep.mubr.f32.mxu0 0.0
    %586 = vmatmul.mubr.f32.gmra.mrb[0].mxu0 %v412
    %v587 = vpop.f32.mrb[0].mxu0
    %v588 = vadd.f32 %v399, %v587
    %v589 = vpop.f32.mrb[0].mxu0
    %v590 = vadd.f32 %v399, %v589
    %591 = vdwg.mxu0
    %592 = vmatprep.subr.mxu0 %v354
    %593 = vmatpush1.msra.mxu0 %v353
    %594 = vmatprep.subr.mxu0 %v360
    %595 = vmatpush1.msra.mxu0 %v359
    %596 = vmatprep.subr.mxu0 %v366
    %597 = vmatpush1.msra.mxu0 %v365
    %598 = vmatprep.subr.mxu0 %v372
    %599 = vmatpush1.msra.mxu0 %v371
    %600 = vmatprep.subr.mxu0 0.0
    %601 = vmatpush1.msra.mxu0 0.0
    %602 = vmatprep.subr.mxu0 0.0
    %603 = vmatpush1.msra.mxu0 0.0
    %604 = vmatprep.subr.mxu0 0.0
    %605 = vmatpush1.msra.mxu0 0.0
    %606 = vmatprep.subr.mxu0 0.0
    %607 = vmatpush1.msra.mxu0 0.0
    %608 = vmatprep.subr.mxu0 0.0
    %609 = vmatpush1.msra.mxu0 0.0
    %610 = vmatprep.subr.mxu0 0.0
    %611 = vmatpush1.msra.mxu0 0.0
    %612 = vmatprep.subr.mxu0 0.0
    %613 = vmatpush1.msra.mxu0 0.0
    %614 = vmatprep.subr.mxu0 0.0
    %615 = vmatpush1.msra.mxu0 0.0
    %616 = vmatprep.subr.mxu0 0.0
    %617 = vmatpush1.msra.mxu0 0.0
    %618 = vmatprep.subr.mxu0 0.0
    %619 = vmatpush1.msra.mxu0 0.0
    %620 = vmatprep.subr.mxu0 0.0
    %621 = vmatpush1.msra.mxu0 0.0
    %622 = vmatprep.subr.mxu0 0.0
    %623 = vmatpush1.msra.mxu0 0.0
    %624 = vmatprep.subr.mxu0 0.0
    %625 = vmatpush1.msra.mxu0 0.0
    %626 = vmatprep.subr.mxu0 0.0
    %627 = vmatpush1.msra.mxu0 0.0
    %628 = vmatprep.subr.mxu0 0.0
    %629 = vmatpush1.msra.mxu0 0.0
    %630 = vmatprep.subr.mxu0 0.0
    %631 = vmatpush1.msra.mxu0 0.0
    %632 = vmatprep.subr.mxu0 0.0
    %633 = vmatpush1.msra.mxu0 0.0
    %634 = vmatprep.subr.mxu0 0.0
    %635 = vmatpush1.msra.mxu0 0.0
    %636 = vmatprep.subr.mxu0 0.0
    %637 = vmatpush1.msra.mxu0 0.0
    %638 = vmatprep.subr.mxu0 0.0
    %639 = vmatpush1.msra.mxu0 0.0
    %640 = vmatprep.subr.mxu0 0.0
    %641 = vmatpush1.msra.mxu0 0.0
    %642 = vmatprep.subr.mxu0 0.0
    %643 = vmatpush1.msra.mxu0 0.0
    %644 = vmatprep.subr.mxu0 0.0
    %645 = vmatpush1.msra.mxu0 0.0
    %646 = vmatprep.subr.mxu0 0.0
    %647 = vmatpush1.msra.mxu0 0.0
    %648 = vmatprep.subr.mxu0 0.0
    %649 = vmatpush1.msra.mxu0 0.0
    %650 = vmatprep.subr.mxu0 0.0
    %651 = vmatpush1.msra.mxu0 0.0
    %652 = vmatprep.subr.mxu0 0.0
    %653 = vmatpush1.msra.mxu0 0.0
    %654 = vmatprep.subr.mxu0 0.0
    %655 = vmatpush1.msra.mxu0 0.0
    %656 = vmatprep.mubr.f32.mxu0 0.0
    %657 = vmatmul.mubr.f32.gmra.mrb[0].mxu0 %v403
    %v658 = vpop.f32.mrb[0].mxu0
    %v659 = vadd.f32 %v384, %v658
    %v660 = vpop.f32.mrb[0].mxu0
    %v661 = vadd.f32 %v384, %v660
    %662 = vmatprep.mubr.f32.mxu0 0.0
    %663 = vmatmul.mubr.f32.gmra.mrb[0].mxu0 %v406
    %v664 = vpop.f32.mrb[0].mxu0
    %v665 = vadd.f32 %v389, %v664
    %v666 = vpop.f32.mrb[0].mxu0
    %v667 = vadd.f32 %v389, %v666
    %668 = vmatprep.mubr.f32.mxu0 0.0
    %669 = vmatmul.mubr.f32.gmra.mrb[0].mxu0 %v409
    %v670 = vpop.f32.mrb[0].mxu0
    %v671 = vadd.f32 %v394, %v670
    %v672 = vpop.f32.mrb[0].mxu0
    %v673 = vadd.f32 %v394, %v672
    %674 = vmatprep.mubr.f32.mxu0 0.0
    %675 = vmatmul.mubr.f32.gmra.mrb[0].mxu0 %v412
    %v676 = vpop.f32.mrb[0].mxu0
    %v677 = vadd.f32 %v399, %v676
    %v678 = vpop.f32.mrb[0].mxu0
    %v679 = vadd.f32 %v399, %v678
    %680 = vdwg.mxu0
    %v681 = vmax.f32 %v481, 0.0
    %v682 = vmax.f32 %v483, 0.0
    %v683 = vmax.f32 %v570, 0.0
    %v684 = vmax.f32 %v572, 0.0
    %v685 = vmax.f32 %v659, 0.0
    %v686 = vmax.f32 %v661, 0.0
    %v687 = vmax.f32 %v487, 0.0
    %v688 = vmax.f32 %v489, 0.0
    %v689 = vmax.f32 %v576, 0.0
    %v690 = vmax.f32 %v578, 0.0
    %v691 = vmax.f32 %v665, 0.0
    %v692 = vmax.f32 %v667, 0.0
    %v693 = vmax.f32 %v493, 0.0
    %v694 = vmax.f32 %v495, 0.0
    %v695 = vmax.f32 %v582, 0.0
    %v696 = vmax.f32 %v584, 0.0
    %v697 = vmax.f32 %v671, 0.0
    %v698 = vmax.f32 %v673, 0.0
    %v699 = vmax.f32 %v499, 0.0
    %v700 = vmax.f32 %v501, 0.0
    %v701 = vmax.f32 %v588, 0.0
    %v702 = vmax.f32 %v590, 0.0
    %v703 = vmax.f32 %v677, 0.0
    %v704 = vmax.f32 %v679, 0.0
    %v705 = vld [vmem:[%s5] sm:$0xff]
    %v706 = vld [vmem:[%s5 + $0x8] sm:$0xff]
    %v707 = vld [vmem:[%s5 + $0x10] sm:$0xff]
    %v708 = vld [vmem:[%s5 + $0x18] sm:$0xff]
    %710 = vset.pattern.permute.xlu0 0
    %711 = vperm.xlu0 %710, %v705
    %v712 = vpop.permute.xlu0 %711
    %715 = vset.pattern.permute.xlu0 0
    %716 = vperm.xlu0 %715, %v706
    %v717 = vpop.permute.xlu0 %716
    %720 = vset.pattern.permute.xlu0 0
    %721 = vperm.xlu0 %720, %v707
    %v722 = vpop.permute.xlu0 %721
    %725 = vset.pattern.permute.xlu0 0
    %726 = vperm.xlu0 %725, %v708
    %v727 = vpop.permute.xlu0 %726
    %v729 = vmul.f32 %v681, %v712
    %v730 = vmul.f32 %v682, %v712
    %v731 = vmul.f32 %v683, %v712
    %v732 = vmul.f32 %v684, %v712
    %v733 = vmul.f32 %v685, %v712
    %v734 = vmul.f32 %v686, %v712
    %v735 = vmul.f32 %v687, %v717
    %v736 = vmul.f32 %v688, %v717
    %v737 = vmul.f32 %v689, %v717
    %v738 = vmul.f32 %v690, %v717
    %v739 = vmul.f32 %v691, %v717
    %v740 = vmul.f32 %v692, %v717
    %v741 = vmul.f32 %v693, %v722
    %v742 = vmul.f32 %v694, %v722
    %v743 = vmul.f32 %v695, %v722
    %v744 = vmul.f32 %v696, %v722
    %v745 = vmul.f32 %v697, %v722
    %v746 = vmul.f32 %v698, %v722
    %v747 = vmul.f32 %v699, %v727
    %v748 = vmul.f32 %v700, %v727
    %v749 = vmul.f32 %v701, %v727
    %v750 = vmul.f32 %v702, %v727
    %v751 = vmul.f32 %v703, %v727
    %v752 = vmul.f32 %v704, %v727
    %v753 = vadd.f32 %v729, %v735
    %v754 = vadd.f32 %v753, %v741
    %v755 = vadd.f32 %v754, %v747
    %v756 = vrot.slane %v755, 4
    %v757 = vadd.f32 %v755, %v756
    %v758 = vrot.slane %v757, 2
    %v759 = vadd.f32 %v757, %v758
    %v760 = vrot.slane %v759, 1
    %v761 = vadd.f32 %v759, %v760
    %v762 = vadd.f32 %v730, %v736
    %v763 = vadd.f32 %v762, %v742
    %v764 = vadd.f32 %v763, %v748
    %v765 = vrot.slane %v764, 4
    %v766 = vadd.f32 %v764, %v765
    %v767 = vrot.slane %v766, 2
    %v768 = vadd.f32 %v766, %v767
    %v769 = vrot.slane %v768, 1
    %v770 = vadd.f32 %v768, %v769
    %v771 = vadd.f32 %v731, %v737
    %v772 = vadd.f32 %v771, %v743
    %v773 = vadd.f32 %v772, %v749
    %v774 = vrot.slane %v773, 4
    %v775 = vadd.f32 %v773, %v774
    %v776 = vrot.slane %v775, 2
    %v777 = vadd.f32 %v775, %v776
    %v778 = vrot.slane %v777, 1
    %v779 = vadd.f32 %v777, %v778
    %v780 = vadd.f32 %v732, %v738
    %v781 = vadd.f32 %v780, %v744
    %v782 = vadd.f32 %v781, %v750
    %v783 = vrot.slane %v782, 4
    %v784 = vadd.f32 %v782, %v783
    %v785 = vrot.slane %v784, 2
    %v786 = vadd.f32 %v784, %v785
    %v787 = vrot.slane %v786, 1
    %v788 = vadd.f32 %v786, %v787
    %v789 = vadd.f32 %v733, %v739
    %v790 = vadd.f32 %v789, %v745
    %v791 = vadd.f32 %v790, %v751
    %v792 = vrot.slane %v791, 4
    %v793 = vadd.f32 %v791, %v792
    %v794 = vrot.slane %v793, 2
    %v795 = vadd.f32 %v793, %v794
    %v796 = vrot.slane %v795, 1
    %v797 = vadd.f32 %v795, %v796
    %v798 = vadd.f32 %v734, %v740
    %v799 = vadd.f32 %v798, %v746
    %v800 = vadd.f32 %v799, %v752
    %v801 = vrot.slane %v800, 4
    %v802 = vadd.f32 %v800, %v801
    %v803 = vrot.slane %v802, 2
    %v804 = vadd.f32 %v802, %v803
    %v805 = vrot.slane %v804, 1
    %v806 = vadd.f32 %v804, %v805
    %v807 = vld [vmem:[#allocation2] sm:$0x1]
    %809 = vset.pattern.permute.xlu0 0
    %810 = vperm.xlu0 %809, %v807
    %v811 = vpop.permute.xlu0 %810
    %v813 = vlaneseq
    %v814 = vshrl.u32 %v813, 7
    %v815 = vsub.s32 0, %v814
    %v816 = vrot.slane %v811, %v815
    %v817 = vadd.f32 %v761, %v816
    %v818 = vadd.f32 %v770, %v816
    %v819 = vadd.f32 %v779, %v816
    %v820 = vadd.f32 %v788, %v816
    %v821 = vadd.f32 %v797, %v816
    %v822 = vadd.f32 %v806, %v816
    %v829 = vcombine.low %v817, %v818
    %v830 = vcombine.low %v819, %v820
    %v831 = vcombine.low %v821, %v822
    %v833 = vunpack.c.l.s4 1966171168
    %v834 = vunpack.c.0.s8 %v833
    %v835 = vlaneseq
    %v836 = vshrl.u32 %v835, 7
    %v837 = vsub.s32 %v834, %v836
    %v838 = vrot.slane %v829, %v837
    %v840 = vunpack.c.l.s4 1966171168
    %v841 = vunpack.c.0.s8 %v840
    %v842 = vlaneseq
    %v843 = vshrl.u32 %v842, 7
    %v844 = vsub.s32 %v841, %v843
    %v845 = vrot.slane %v830, %v844
    %v847 = vunpack.c.l.s4 1966171168
    %v848 = vunpack.c.0.s8 %v847
    %v849 = vlaneseq
    %v850 = vshrl.u32 %v849, 7
    %v851 = vsub.s32 %v848, %v850
    %v852 = vrot.slane %v831, %v851
    %v853 = vcombine.low %v838, %v845
    %v855 = vunpack.c.l.s4 1966171168
    %v856 = vunpack.c.0.s8 %v855
    %v857 = vlaneseq
    %v858 = vshrl.u32 %v857, 7
    %v859 = vsub.s32 %v856, %v858
    %v860 = vrot.slane %v853, %v859
    %v862 = vunpack.c.l.s4 1966171168
    %v863 = vunpack.c.0.s8 %v862
    %v864 = vlaneseq
    %v865 = vshrl.u32 %v864, 7
    %v866 = vsub.s32 %v863, %v865
    %v867 = vrot.slane %v852, %v866
    %v868 = vcombine.low %v860, %v867
    %v870 = vlaneseq
    %vm871 = vcmp.ge.s32.totalorder %v870, 0
    %vm872 = vcmp.lt.s32.totalorder %v870, 768
    %vm873 = vmand %vm871, %vm872
    %874 = vst.msk [vmem:[#allocation3] sm:$0x3f] %vm873, %v868
    // Predicated region
    $region30: #{tpu_custom_call.1} parent=1 // pred_check
      _
    $region31: #{tpu_custom_call.1} parent=1 // pred_check_branch
      %876 = sbr.rel (0) target = $region33
    $region32: #{tpu_custom_call.1} parent=1 // pred_region
      %s878 = ssub.s32 96, 96
      %879 = vsyncadd [#allocation4], %s878
      %s881 = sshll.u32 [#allocation3], 4
      %s882 = int_to_ptr.vmem [resolvable:$true] %s881
      %884 = dma.vmem_to_hbm [thread:$0]  %s882, 96, %s7, [#allocation4]
    $region33: #{tpu_custom_call.1} parent=1 // pred_fallthru
      _
    // Predicated region
    $region34: #{tpu_custom_call.1} parent=1 // pred_check
      _
    $region35: #{tpu_custom_call.1} parent=1 // pred_check_branch
      %886 = sbr.rel (0) target = $region37
    $region36: #{tpu_custom_call.1} parent=1 // pred_region
      %887 = dma.done [#allocation4], 96
    $region37: #{tpu_custom_call.1} parent=1 // pred_fallthru
      _
    %888 = vsyncpa [#allocation4], 1

</llo_original>
